<compile_context>
chip_gen: v7x
topology: tpu7x:2x2x1
jax: 0.10.0
libtpu: 0.0.40
codegen_flags: <defaults>
</compile_context>

<pallas_src>
from functools import partial

import jax
import jax.numpy as jnp
from jax.experimental import pallas as pl
from jax.experimental.pallas import tpu as pltpu


# ------------------------------ kernel body --------------------------------

def embedder_kernel(idx_ref, tab_ref, o_ref, *, n_type):
    # idx_ref : (TL, 2) int32   col 0 = type id, col 1 = staff id
    # tab_ref : (n_type + n_staff, D)  concat[type_emb; staff_emb], VMEM resident
    # o_ref   : (TL, D)
    idx = idx_ref[...]
    tl = idx.shape[0]
    n_total = tab_ref.shape[0]

    t = idx[:, 0:1]                        # (TL, 1) rows in [0, n_type)
    s = idx[:, 1:2] + n_type               # (TL, 1) rows in [n_type, n_total)

    # Combined two-hot selection matrix: exactly two ones per row (type row and
    # offset staff row never collide for in-range indices), so a single MXU
    # matmul performs both gathers and the add, with f32 accumulation.
    lane = jax.lax.broadcasted_iota(jnp.int32, (tl, n_total), 1)
    two_hot = ((lane == t) | (lane == s)).astype(tab_ref.dtype)

    out = jnp.dot(two_hot, tab_ref[...], preferred_element_type=jnp.float32)
    o_ref[...] = out.astype(o_ref.dtype)


# ------------------------------ wrapper -------------------------------------

def _round_up(x, m):
    return ((x + m - 1) // m) * m


def pallas_embedder(seq, type_emb, staff_emb, *, row_tile=1024,
                    vmem_budget_bytes=24 << 20):
    """seq: (B, L, 2) integer; type_emb: (n_type, D); staff_emb: (n_staff, D)."""
    B, L, _ = seq.shape
    n_type, D = type_emb.shape
    n_staff = staff_emb.shape[0]
    n_total = n_type + n_staff
    out_dtype = type_emb.dtype
    N = B * L

    # One concatenated table, DMA'd into VMEM once and resident across the grid.
    table = jnp.concatenate([type_emb, staff_emb.astype(out_dtype)], axis=0)

    # Row-tile budget: double-buffered output tile + double-buffered index tile
    # + resident table must fit the explicit VMEM budget (portable to v7x 64MiB).
    itemsize = jnp.dtype(out_dtype).itemsize
    per_row = 2 * D * itemsize + 2 * 2 * 4          # 2x out tile row + 2x idx row
    table_bytes = n_total * D * itemsize
    avail = max(vmem_budget_bytes - 2 * table_bytes, 1 << 20)
    tl_cap = max(8, (avail // per_row) // 8 * 8)
    tl = int(min(row_tile, tl_cap, _round_up(N, 8)))

    # Single pad of the merged (N, 2) index stream; padded rows look up valid
    # row 0 of each table and are sliced off after the call.
    idx = seq.reshape(N, 2).astype(jnp.int32)
    n_pad = _round_up(N, tl)
    if n_pad != N:
        idx = jnp.pad(idx, ((0, n_pad - N), (0, 0)))

    vmem_limit = int(min(max(2 * (tl * per_row + 2 * table_bytes) + (4 << 20),
                             16 << 20),
                         64 << 20))

    out = pl.pallas_call(
        partial(embedder_kernel, n_type=n_type),
        out_shape=jax.ShapeDtypeStruct((n_pad, D), out_dtype),
        grid=(n_pad // tl,),
        in_specs=[
            pl.BlockSpec((tl, 2), lambda i: (i, 0)),        # merged token indices
            pl.BlockSpec((n_total, D), lambda i: (0, 0)),   # resident fused table
        ],
        # Sweep knob: pipeline_mode=pl.Buffered(3) here if writeback-bound.
        out_specs=pl.BlockSpec((tl, D), lambda i: (i, 0)),
        compiler_params=pltpu.CompilerParams(
            dimension_semantics=("parallel",),
            vmem_limit_bytes=vmem_limit),
    )(idx, table)

    return out[:N].reshape(B, L, D)


# ------------------------------ params --------------------------------------

def init_params(key, *, d_word_vec, n_type, n_staff):
    k0, k1 = jax.random.split(key, 2)
    scale = 0.02
    type_emb = jax.random.normal(k0, (n_type, d_word_vec), jnp.float32) * scale
    # nn.Embedding(padding_idx=SemanticElementType.PAD == 0): padding row zeroed.
    type_emb = type_emb.at[0].set(0.0)
    staff_emb = jax.random.normal(k1, (n_staff, d_word_vec), jnp.float32) * scale
    return {"type_emb": type_emb, "staff_emb": staff_emb}


def embedder_forward(params, seq):
    # TODO(synk): padding_idx only affects gradients (training); the forward
    # lookup of the zeroed PAD row is reproduced exactly, forward-only kernel.
    # NOTE: out-of-range indices give a zero row (not an error) unlike PyTorch.
    return pallas_embedder(seq, params["type_emb"], params["staff_emb"])


# --------------------------------- main --------------------------------------

if __name__ == "__main__":
    B, L = 2, 8
    d_word_vec = 128   # keep D a multiple of 128 -> lane-dense (unmasked) stores
    n_type = 16        # stands in for SemanticElementType.MAX (PAD = 0)
    n_staff = 8        # stands in for STAFF_MAX

    root = jax.random.PRNGKey(0)
    kp, k1, k2 = jax.random.split(root, 3)

    params = init_params(kp, d_word_vec=d_word_vec, n_type=n_type, n_staff=n_staff)

    seq = jnp.stack(
        [jax.random.randint(k1, (B, L), 0, n_type),     # includes PAD=0 sometimes
         jax.random.randint(k2, (B, L), 0, n_staff)],
        axis=-1).astype(jnp.int32)                      # (B, L, 2)

    fwd = jax.jit(embedder_forward)
    out = jax.block_until_ready(fwd(params, seq))

    # Reference: plain-JAX gather semantics of the PyTorch module.
    ref = params["type_emb"][seq[:, :, 0]] + params["staff_emb"][seq[:, :, 1]]

    assert out.shape == (B, L, d_word_vec)
    assert bool(jnp.all(jnp.isfinite(out)))
    assert bool(jnp.allclose(out, ref, atol=1e-6, rtol=1e-6))
    print("KERNEL_OK")
</pallas_src>

<mosaic_0001>
module attributes {stable_mosaic.version = 11 : i64} {
  func.func @embedder_kernel(%arg0: i32, %arg1: memref<16x2xi32, #tpu.memory_space<vmem>>, %arg2: memref<24x128xf32, #tpu.memory_space<vmem>>, %arg3: memref<16x128xf32, #tpu.memory_space<vmem>>) attributes {dimension_semantics = [#tpu.dimension_semantics<parallel>], iteration_bounds = array<i64: 1>, scalar_prefetch = 0 : i64, scratch_operands = 0 : i64, tpu.core_type = #tpu.core_type<tc>, window_params = [{transform_indices = @transform_0, window_bounds = array<i64: 16, 2>}, {pipeline_mode = #tpu.pipeline_mode<synchronous>, transform_indices = @transform_1, window_bounds = array<i64: 24, 128>}, {transform_indices = @transform_2, window_bounds = array<i64: 16, 128>}]} {
    %c0 = arith.constant 0 : index
    %c0_0 = arith.constant 0 : index
    %0 = vector.load %arg1[%c0, %c0_0] : memref<16x2xi32, #tpu.memory_space<vmem>>, vector<16x2xi32>
    %1 = vector.extract_strided_slice %0 {offsets = [0, 0], sizes = [16, 1], strides = [1, 1]} : vector<16x2xi32> to vector<16x1xi32>
    %2 = vector.extract_strided_slice %0 {offsets = [0, 1], sizes = [16, 1], strides = [1, 1]} : vector<16x2xi32> to vector<16x1xi32>
    %c16_i32 = arith.constant 16 : i32
    %3 = vector.broadcast %c16_i32 : i32 to vector<16x1xi32>
    %4 = arith.addi %2, %3 : vector<16x1xi32>
    %5 = tpu.iota {dimensions = array<i32: 1>} : vector<16x24xi32>
    %6 = vector.broadcast %1 : vector<16x1xi32> to vector<16x24xi32>
    %7 = arith.cmpi eq, %5, %6 : vector<16x24xi32>
    %8 = vector.broadcast %4 : vector<16x1xi32> to vector<16x24xi32>
    %9 = arith.cmpi eq, %5, %8 : vector<16x24xi32>
    %10 = arith.ori %7, %9 : vector<16x24xi1>
    %11 = arith.extui %10 : vector<16x24xi1> to vector<16x24xi32>
    %12 = arith.sitofp %11 : vector<16x24xi32> to vector<16x24xf32>
    %c0_1 = arith.constant 0 : index
    %c0_2 = arith.constant 0 : index
    %13 = vector.load %arg2[%c0_1, %c0_2] : memref<24x128xf32, #tpu.memory_space<vmem>>, vector<24x128xf32>
    %cst = arith.constant dense<0.000000e+00> : vector<16x128xf32>
    %14 = tpu.matmul %12, %13, %cst {dimension_numbers = #tpu.dot_dimension_numbers<[1], [0], [0], [1], [0, 0, 1, 1], [], []>} : vector<16x24xf32>, vector<24x128xf32>, vector<16x128xf32> -> vector<16x128xf32>
    %c0_3 = arith.constant 0 : index
    %c0_4 = arith.constant 0 : index
    %15 = vector.load %arg3[%c0_3, %c0_4] : memref<16x128xf32, #tpu.memory_space<vmem>>, vector<16x128xf32>
    tpu.vector_store %arg3[%c0_3, %c0_4], %14 {strides = array<i32>} : memref<16x128xf32, #tpu.memory_space<vmem>>, vector<16x128xf32>,
    return
  }
  func.func @transform_0(%arg0: i32) -> (i32, i32) {
    %c0_i32 = arith.constant 0 : i32
    %c0_i32_0 = arith.constant 0 : i32
    return %arg0, %c0_i32 : i32, i32
  }
  func.func @transform_1(%arg0: i32) -> (i32, i32) {
    %c0_i32 = arith.constant 0 : i32
    %c0_i32_0 = arith.constant 0 : i32
    %c0_i32_1 = arith.constant 0 : i32
    return %c0_i32, %c0_i32_0 : i32, i32
  }
  func.func @transform_2(%arg0: i32) -> (i32, i32) {
    %c0_i32 = arith.constant 0 : i32
    %c0_i32_0 = arith.constant 0 : i32
    return %arg0, %c0_i32 : i32, i32
  }
}

</mosaic_0001>

<llo_original>
// kernel: embedder_forward.1
$region0: #{embedder_forward.1}
  #allocation0 [shape = 'u32[]', space=smem, size = 0x4, offset = 0x4, fixed_abs, tag = 'smem constant byte address 0x4 - core index']
  #allocation1 [shape = 'u32[144,128]{1,0:T(1,128)}', space=vmem, size = 0x12000, scoped, tag = 'internal scratch']
  %s0 = inlined_call_operand.vmem [shape: s32[16,2], index: 0, kind: input, shape index: {}]
  %s1 = inlined_call_operand.vmem [shape: f32[24,128], index: 1, kind: input, shape index: {}]
  %s2 = inlined_call_operand.hbm [shape: f32[16,128], index: 2, kind: output, shape index: {}]
  %s3 = sld [smem:[#allocation0]]
  $region18: #{embedder_forward.1} parent=0
    _
  %s5 = ssub.s32 1, %s3
  %s6 = scalar_select 0, %s5, %s3
  $region1: #{embedder_forward.1} parent=0
    #allocation2 [shape = 'u8[8192]{0}', space=vmem, size = 0x2000, scoped, tag = 'output window, operand 0, single buffered']
    #allocation3 [shape = 's32[1]{0}', space=sflag, size = 0x4, scoped, tag = 'scoped memory for embedder_forward.1']
    %7 = vsyncpa [#allocation3], 0
    // Predicated region
    $region2: #{embedder_forward.1} parent=1 // pred_check
      _
    $region3: #{embedder_forward.1} parent=1 // pred_check_branch
      %9 = sbr.rel (0) target = $region5
    $region4: #{embedder_forward.1} parent=1 // pred_region
      _
    $region5: #{embedder_forward.1} parent=1 // pred_fallthru
      _
    // Predicated region
    $region6: #{embedder_forward.1} parent=1 // pred_check
      _
    $region7: #{embedder_forward.1} parent=1 // pred_check_branch
      %11 = sbr.rel (0) target = $region9
    $region8: #{embedder_forward.1} parent=1 // pred_region
      _
    $region9: #{embedder_forward.1} parent=1 // pred_fallthru
      _
    %v12 = vld [vmem:[%s0] sm:$0xff]
    %v13 = vld [vmem:[%s0 + $0x8] sm:$0xff]
    %v14 = vadd.s32 %v12, 16
    %v15 = vadd.s32 %v13, 16
    %v16 = vlaneseq
    %v17 = vand.u32 %v16, 127
    %18 = vset.pattern.permute.xlu0 0
    %19 = vperm.xlu0 %18, %v12
    %v20 = vpop.permute.xlu0 %19
    %21 = vset.pattern.permute.xlu0 0
    %22 = vperm.xlu0 %21, %v13
    %v23 = vpop.permute.xlu0 %22
    %vm24 = vcmp.eq.s32.totalorder %v17, %v20
    %vm25 = vcmp.eq.s32.totalorder %v17, %v23
    %26 = vset.pattern.permute.xlu0 1
    %27 = vperm.xlu0 %26, %v14
    %v28 = vpop.permute.xlu0 %27
    %29 = vset.pattern.permute.xlu0 1
    %30 = vperm.xlu0 %29, %v15
    %v31 = vpop.permute.xlu0 %30
    %vm32 = vcmp.eq.s32.totalorder %v17, %v28
    %vm33 = vcmp.eq.s32.totalorder %v17, %v31
    %vm34 = vmor %vm24, %vm32
    %vm35 = vmor %vm25, %vm33
    %v36 = vsel %vm34, 1, 0
    %v37 = vsel %vm35, 1, 0
    %v38 = vcvt.s32.f32 %v36
    %v39 = vcvt.s32.f32 %v37
    %v40 = vld [vmem:[%s1] sm:$0xff]
    %v41 = vld [vmem:[%s1 + $0x8] sm:$0xff]
    %v42 = vld [vmem:[%s1 + $0x10] sm:$0xff]
    %vm43 = vcmask 195584
    %v45 = vsel %vm43, %v38, 0
    %v48 = vsel %vm43, %v39, 0
    %50 = vmatprep.subr.mxu0 0.0
    %51 = vmatpush1.msra.mxu0 %v40
    %52 = vmatprep.subr.mxu0 0.0
    %53 = vmatpush1.msra.mxu0 %v41
    %54 = vmatprep.subr.mxu0 0.0
    %55 = vmatpush1.msra.mxu0 %v42
    %56 = vmatprep.subr.mxu0 0.0
    %57 = vmatpush1.msra.mxu0 0.0
    %58 = vmatprep.subr.mxu0 0.0
    %59 = vmatpush1.msra.mxu0 0.0
    %60 = vmatprep.subr.mxu0 0.0
    %61 = vmatpush1.msra.mxu0 0.0
    %62 = vmatprep.subr.mxu0 0.0
    %63 = vmatpush1.msra.mxu0 0.0
    %64 = vmatprep.subr.mxu0 0.0
    %65 = vmatpush1.msra.mxu0 0.0
    %66 = vmatprep.subr.mxu0 0.0
    %67 = vmatpush1.msra.mxu0 0.0
    %68 = vmatprep.subr.mxu0 0.0
    %69 = vmatpush1.msra.mxu0 0.0
    %70 = vmatprep.subr.mxu0 0.0
    %71 = vmatpush1.msra.mxu0 0.0
    %72 = vmatprep.subr.mxu0 0.0
    %73 = vmatpush1.msra.mxu0 0.0
    %74 = vmatprep.subr.mxu0 0.0
    %75 = vmatpush1.msra.mxu0 0.0
    %76 = vmatprep.subr.mxu0 0.0
    %77 = vmatpush1.msra.mxu0 0.0
    %78 = vmatprep.subr.mxu0 0.0
    %79 = vmatpush1.msra.mxu0 0.0
    %80 = vmatprep.subr.mxu0 0.0
    %81 = vmatpush1.msra.mxu0 0.0
    %82 = vmatprep.subr.mxu0 0.0
    %83 = vmatpush1.msra.mxu0 0.0
    %84 = vmatprep.subr.mxu0 0.0
    %85 = vmatpush1.msra.mxu0 0.0
    %86 = vmatprep.subr.mxu0 0.0
    %87 = vmatpush1.msra.mxu0 0.0
    %88 = vmatprep.subr.mxu0 0.0
    %89 = vmatpush1.msra.mxu0 0.0
    %90 = vmatprep.subr.mxu0 0.0
    %91 = vmatpush1.msra.mxu0 0.0
    %92 = vmatprep.subr.mxu0 0.0
    %93 = vmatpush1.msra.mxu0 0.0
    %94 = vmatprep.subr.mxu0 0.0
    %95 = vmatpush1.msra.mxu0 0.0
    %96 = vmatprep.subr.mxu0 0.0
    %97 = vmatpush1.msra.mxu0 0.0
    %98 = vmatprep.subr.mxu0 0.0
    %99 = vmatpush1.msra.mxu0 0.0
    %100 = vmatprep.subr.mxu0 0.0
    %101 = vmatpush1.msra.mxu0 0.0
    %102 = vmatprep.subr.mxu0 0.0
    %103 = vmatpush1.msra.mxu0 0.0
    %104 = vmatprep.subr.mxu0 0.0
    %105 = vmatpush1.msra.mxu0 0.0
    %106 = vmatprep.subr.mxu0 0.0
    %107 = vmatpush1.msra.mxu0 0.0
    %108 = vmatprep.subr.mxu0 0.0
    %109 = vmatpush1.msra.mxu0 0.0
    %110 = vmatprep.subr.mxu0 0.0
    %111 = vmatpush1.msra.mxu0 0.0
    %112 = vmatprep.subr.mxu0 0.0
    %113 = vmatpush1.msra.mxu0 0.0
    %114 = vmatprep.mubr.f32.mxu0 0.0
    %115 = vmatmul.mubr.f32.gmra.mrb[0].mxu0 %v45
    %v116 = vpop.f32.mrb[0].mxu0
    %v117 = vadd.f32 0.0, %v116
    %v118 = vpop.f32.mrb[0].mxu0
    %119 = vmatprep.mubr.f32.mxu0 0.0
    %120 = vmatmul.mubr.f32.gmra.mrb[0].mxu0 %v48
    %v121 = vpop.f32.mrb[0].mxu0
    %v122 = vadd.f32 0.0, %v121
    %v123 = vpop.f32.mrb[0].mxu0
    %124 = vdwg.mxu0
    %125 = vst [vmem:[#allocation2] sm:$0xff] %v117
    %126 = vst [vmem:[#allocation2 + $0x8] sm:$0xff] %v122
    // Predicated region
    $region10: #{embedder_forward.1} parent=1 // pred_check
      _
    $region11: #{embedder_forward.1} parent=1 // pred_check_branch
      %128 = sbr.rel (0) target = $region13
    $region12: #{embedder_forward.1} parent=1 // pred_region
      %s130 = ssub.s32 256, 256
      %131 = vsyncadd [#allocation3], %s130
      %s132 = sshll.u32 [#allocation2], 4
      %s133 = int_to_ptr.vmem [resolvable:$true] %s132
      %138 = dma.vmem_to_hbm [thread:$0]  %s133, 256, %s2, [#allocation3], 128, 128, 8
    $region13: #{embedder_forward.1} parent=1 // pred_fallthru
      _
    // Predicated region
    $region14: #{embedder_forward.1} parent=1 // pred_check
      _
    $region15: #{embedder_forward.1} parent=1 // pred_check_branch
      %140 = sbr.rel (0) target = $region17
    $region16: #{embedder_forward.1} parent=1 // pred_region
      %141 = dma.done [#allocation3], 256
    $region17: #{embedder_forward.1} parent=1 // pred_fallthru
      _
    %142 = vsyncpa [#allocation3], 1

</llo_original>
